<compile_context>
chip_gen: v7x
topology: tpu7x:2x2x1
jax: 0.10.0
libtpu: 0.0.40
codegen_flags: <defaults>
</compile_context>

<pallas_src>
import jax
import jax.numpy as jnp
from jax import lax
from jax.experimental import pallas as pl
from jax.experimental.pallas import tpu as pltpu

SMOOTH_FACTOR = 0.1   # SoftBCEWithLogitsLoss(smooth_factor=0.1)
DICE_SMOOTH = 0.0     # smp DiceLoss default
DICE_EPS = 1e-7       # smp DiceLoss default
LANE = 128
TM_MAX = 2048         # rows per tile: 2048*128*4B = 1 MiB per f32 input buffer


def _cdiv(a, b):
    return -(-a // b)


def _make_partials_kernel(tm, total, needs_mask):
    """Kernel computing per-tile partial sums of [p*t, p, t, bce] as (8,128) slabs."""
    full_rows, rem = divmod(total, LANE)

    def kernel(x_ref, t_ref, out_ref):
        x = x_ref[...].astype(jnp.float32)   # (tm, 128) logits
        t = t_ref[...].astype(jnp.float32)   # (tm, 128) targets

        # --- shared transcendental: one exp feeds sigmoid AND the BCE softplus
        e = jnp.exp(-jnp.abs(x))                       # EUP exp, reused twice
        r = pl.reciprocal(1.0 + e)                     # exact; approx=True possible at lower precision
        p = jnp.where(x >= 0, r, e * r)                # == sigmoid(x)

        # label smoothing: st = t*(1-s) + (1-t)*s
        st = t * (1.0 - 2.0 * SMOOTH_FACTOR) + SMOOTH_FACTOR
        # numerically stable BCE-with-logits (elementwise)
        bce = jnp.maximum(x, 0.0) - x * st + jnp.log1p(e)

        if needs_mask:
            # Zero out padded elements: an x=0,t=0 pad would contribute log(2)
            # to the BCE sum and 0.5 to sum(p).  t itself is already 0 in pad.
            row = (lax.broadcasted_iota(jnp.int32, (tm, LANE), 0)
                   + pl.program_id(0) * tm)
            lane = lax.broadcasted_iota(jnp.int32, (tm, LANE), 1)
            if rem == 0:
                valid = row < full_rows
            else:
                valid = (row < full_rows) | ((row == full_rows) & (lane < rem))
            m = valid.astype(jnp.float32)
            p = p * m
            bce = bce * m

        # --- lane-shaped partial sums: sum over the leading chunk axis only
        # (pure VPU adds; cross-lane/sublane reduction deferred to XLA glue)
        def chunk_sum(v):
            return jnp.sum(v.reshape(-1, 8, LANE), axis=0)   # (8, 128)

        out_ref[0, 0] = chunk_sum(p * t)   # dice intersection partial
        out_ref[0, 1] = chunk_sum(p)       # sum(sigmoid) partial
        out_ref[0, 2] = chunk_sum(t)       # sum(target) partial
        out_ref[0, 3] = chunk_sum(bce)     # bce-sum partial

    return kernel


def _loss_partial_sums(x2, t2, tm, total):
    """Returns f32[4] = [sum(p*t), sum(p), sum(t), sum(bce)] over the true elements."""
    R_pad = x2.shape[0]
    G = R_pad // tm
    needs_mask = (R_pad * LANE != total)
    kernel = _make_partials_kernel(tm, total, needs_mask)

    partials = pl.pallas_call(
        kernel,
        out_shape=jax.ShapeDtypeStruct((G, 4, 8, LANE), jnp.float32),
        grid_spec=pltpu.PrefetchScalarGridSpec(
            num_scalar_prefetch=0,
            grid=(G,),
            in_specs=[
                pl.BlockSpec((tm, LANE), lambda i: (i, 0)),
                pl.BlockSpec((tm, LANE), lambda i: (i, 0)),
            ],
            out_specs=pl.BlockSpec((1, 4, 8, LANE), lambda i: (i, 0, 0, 0)),
        ),
        compiler_params=pltpu.CompilerParams(
            # each grid step writes its own output block -> megacore-shardable (v7x)
            dimension_semantics=("parallel",)),
    )(x2, t2)

    return jnp.sum(partials, axis=(0, 2, 3))   # (4,)


def custom_loss(output, mask):
    """output, mask: NCHW arrays of identical shape; returns scalar loss."""
    assert output.shape == mask.shape
    total = output.size

    # tile sizing: big, (8,*)-aligned, minimal padding waste
    R = _cdiv(total, LANE)                  # rows needed
    G = _cdiv(R, TM_MAX)                    # grid size
    tm = _cdiv(_cdiv(R, G), 8) * 8          # rows per tile (multiple of 8, <= TM_MAX)
    R_pad = G * tm
    pad = R_pad * LANE - total

    # keep native dtype (bf16/f32/bool/int) -> kernel casts to f32 on the fly
    x_flat = output.reshape(-1)
    t_flat = mask.reshape(-1)
    if pad:
        x_flat = jnp.pad(x_flat, (0, pad))
        t_flat = jnp.pad(t_flat, (0, pad))
    x2 = x_flat.reshape(R_pad, LANE)
    t2 = t_flat.reshape(R_pad, LANE)

    inter, sum_p, sum_t, bce_sum = _loss_partial_sums(x2, t2, tm, total)

    # DiceLoss (mode='binary', from_logits=True): single class, global sums
    card = sum_p + sum_t
    dice_score = (2.0 * inter + DICE_SMOOTH) / jnp.maximum(
        card + DICE_SMOOTH, DICE_EPS)
    has_fg = (sum_t > 0).astype(jnp.float32)
    dice_loss = (1.0 - dice_score) * has_fg

    # SoftBCEWithLogitsLoss, reduction='mean'
    bce_loss = bce_sum / total

    return dice_loss * 0.7 + bce_loss * 0.3


def _reference_loss(output, mask):
    x = output.astype(jnp.float32)
    t = mask.astype(jnp.float32)
    p = jax.nn.sigmoid(x)
    inter = jnp.sum(p * t)
    card = jnp.sum(p + t)
    dice_score = (2.0 * inter + DICE_SMOOTH) / jnp.maximum(
        card + DICE_SMOOTH, DICE_EPS)
    dice_loss = (1.0 - dice_score) * (jnp.sum(t) > 0).astype(jnp.float32)
    st = t * (1.0 - SMOOTH_FACTOR) + (1.0 - t) * SMOOTH_FACTOR
    bce = jnp.maximum(x, 0.0) - x * st + jnp.log1p(jnp.exp(-jnp.abs(x)))
    return dice_loss * 0.7 + jnp.mean(bce) * 0.3


if __name__ == "__main__":
    key = jax.random.PRNGKey(0)
    k1, k2, k3, k4 = jax.random.split(key, 4)

    # Case 1: standard NCHW shape (flattens evenly into 128-lane rows)
    N, C, H, W = 2, 1, 32, 32
    logits = jax.random.normal(k1, (N, C, H, W), dtype=jnp.float32)
    target = (jax.random.uniform(k2, (N, C, H, W)) > 0.5).astype(jnp.float32)
    loss = jax.block_until_ready(custom_loss(logits, target))
    ref = jax.block_until_ready(_reference_loss(logits, target))
    assert jnp.allclose(loss, ref, rtol=1e-5, atol=1e-5), (loss, ref)

    # Case 2: ragged shape (exercises zero-padding + in-kernel validity mask)
    shape2 = (2, 3, 17, 19)
    logits2 = jax.random.normal(k3, shape2, dtype=jnp.float32)
    target2 = (jax.random.uniform(k4, shape2) > 0.5).astype(jnp.float32)
    loss2 = jax.block_until_ready(custom_loss(logits2, target2))
    ref2 = jax.block_until_ready(_reference_loss(logits2, target2))
    assert jnp.allclose(loss2, ref2, rtol=1e-5, atol=1e-5), (loss2, ref2)

    print("KERNEL_OK")
</pallas_src>

<mosaic_0001>
module attributes {stable_mosaic.version = 11 : i64} {
  func.func @kernel(%arg0: i32, %arg1: memref<16x128xf32, #tpu.memory_space<vmem>>, %arg2: memref<16x128xf32, #tpu.memory_space<vmem>>, %arg3: memref<1x4x8x128xf32, #tpu.memory_space<vmem>>) attributes {dimension_semantics = [#tpu.dimension_semantics<parallel>], iteration_bounds = array<i64: 1>, scalar_prefetch = 0 : i64, scratch_operands = 0 : i64, tpu.core_type = #tpu.core_type<tc>, window_params = [{transform_indices = @transform_0, window_bounds = array<i64: 16, 128>}, {transform_indices = @transform_1, window_bounds = array<i64: 16, 128>}, {transform_indices = @transform_2, window_bounds = array<i64: 1, 4, 8, 128>}]} {
    %c0 = arith.constant 0 : index
    %c0_0 = arith.constant 0 : index
    %0 = vector.load %arg1[%c0, %c0_0] : memref<16x128xf32, #tpu.memory_space<vmem>>, vector<16x128xf32>
    %c0_1 = arith.constant 0 : index
    %c0_2 = arith.constant 0 : index
    %1 = vector.load %arg2[%c0_1, %c0_2] : memref<16x128xf32, #tpu.memory_space<vmem>>, vector<16x128xf32>
    %2 = math.absf %0 : vector<16x128xf32>
    %cst = arith.constant 0.000000e+00 : f32
    %3 = vector.broadcast %cst : f32 to vector<16x128xf32>
    %4 = arith.subf %3, %2 : vector<16x128xf32>
    %5 = math.exp %4 : vector<16x128xf32>
    %cst_3 = arith.constant 1.000000e+00 : f32
    %6 = vector.broadcast %cst_3 : f32 to vector<16x128xf32>
    %7 = arith.addf %6, %5 : vector<16x128xf32>
    %8 = tpu.reciprocal %7 : vector<16x128xf32> -> vector<16x128xf32>
    %cst_4 = arith.constant 0.000000e+00 : f32
    %9 = vector.broadcast %cst_4 : f32 to vector<16x128xf32>
    %10 = arith.cmpf oge, %0, %9 : vector<16x128xf32>
    %11 = arith.mulf %5, %8 : vector<16x128xf32>
    %12 = arith.select %10, %8, %11 : vector<16x128xi1>, vector<16x128xf32>
    %cst_5 = arith.constant 8.000000e-01 : f32
    %13 = vector.broadcast %cst_5 : f32 to vector<16x128xf32>
    %14 = arith.mulf %1, %13 : vector<16x128xf32>
    %cst_6 = arith.constant 1.000000e-01 : f32
    %15 = vector.broadcast %cst_6 : f32 to vector<16x128xf32>
    %16 = arith.addf %14, %15 : vector<16x128xf32>
    %cst_7 = arith.constant 0.000000e+00 : f32
    %17 = vector.broadcast %cst_7 : f32 to vector<16x128xf32>
    %18 = arith.maximumf %0, %17 : vector<16x128xf32>
    %19 = arith.mulf %0, %16 : vector<16x128xf32>
    %20 = arith.subf %18, %19 : vector<16x128xf32>
    %21 = math.log1p %5 : vector<16x128xf32>
    %22 = arith.addf %20, %21 : vector<16x128xf32>
    %23 = arith.mulf %12, %1 : vector<16x128xf32>
    %24 = vector.shape_cast %23 : vector<16x128xf32> to vector<2x8x128xf32>
    %cst_8 = arith.constant dense<0.000000e+00> : vector<8x128xf32>
    %25 = vector.multi_reduction <add>, %24, %cst_8 [0] : vector<2x8x128xf32> to vector<8x128xf32>
    %c0_9 = arith.constant 0 : index
    %c0_10 = arith.constant 0 : index
    %c0_11 = arith.constant 0 : index
    %c0_12 = arith.constant 0 : index
    %26 = vector.load %arg3[%c0_9, %c0_10, %c0_11, %c0_12] : memref<1x4x8x128xf32, #tpu.memory_space<vmem>>, vector<1x1x8x128xf32>
    %27 = vector.shape_cast %26 : vector<1x1x8x128xf32> to vector<8x128xf32>
    %28 = vector.shape_cast %25 : vector<8x128xf32> to vector<1x1x8x128xf32>
    tpu.vector_store %arg3[%c0_9, %c0_10, %c0_11, %c0_12], %28 {strides = array<i32>} : memref<1x4x8x128xf32, #tpu.memory_space<vmem>>, vector<1x1x8x128xf32>,
    %29 = vector.shape_cast %12 : vector<16x128xf32> to vector<2x8x128xf32>
    %cst_13 = arith.constant dense<0.000000e+00> : vector<8x128xf32>
    %30 = vector.multi_reduction <add>, %29, %cst_13 [0] : vector<2x8x128xf32> to vector<8x128xf32>
    %c0_14 = arith.constant 0 : index
    %c1 = arith.constant 1 : index
    %c0_15 = arith.constant 0 : index
    %c0_16 = arith.constant 0 : index
    %31 = vector.load %arg3[%c0_14, %c1, %c0_15, %c0_16] : memref<1x4x8x128xf32, #tpu.memory_space<vmem>>, vector<1x1x8x128xf32>
    %32 = vector.shape_cast %31 : vector<1x1x8x128xf32> to vector<8x128xf32>
    %33 = vector.shape_cast %30 : vector<8x128xf32> to vector<1x1x8x128xf32>
    tpu.vector_store %arg3[%c0_14, %c1, %c0_15, %c0_16], %33 {strides = array<i32>} : memref<1x4x8x128xf32, #tpu.memory_space<vmem>>, vector<1x1x8x128xf32>,
    %34 = vector.shape_cast %1 : vector<16x128xf32> to vector<2x8x128xf32>
    %cst_17 = arith.constant dense<0.000000e+00> : vector<8x128xf32>
    %35 = vector.multi_reduction <add>, %34, %cst_17 [0] : vector<2x8x128xf32> to vector<8x128xf32>
    %c0_18 = arith.constant 0 : index
    %c2 = arith.constant 2 : index
    %c0_19 = arith.constant 0 : index
    %c0_20 = arith.constant 0 : index
    %36 = vector.load %arg3[%c0_18, %c2, %c0_19, %c0_20] : memref<1x4x8x128xf32, #tpu.memory_space<vmem>>, vector<1x1x8x128xf32>
    %37 = vector.shape_cast %36 : vector<1x1x8x128xf32> to vector<8x128xf32>
    %38 = vector.shape_cast %35 : vector<8x128xf32> to vector<1x1x8x128xf32>
    tpu.vector_store %arg3[%c0_18, %c2, %c0_19, %c0_20], %38 {strides = array<i32>} : memref<1x4x8x128xf32, #tpu.memory_space<vmem>>, vector<1x1x8x128xf32>,
    %39 = vector.shape_cast %22 : vector<16x128xf32> to vector<2x8x128xf32>
    %cst_21 = arith.constant dense<0.000000e+00> : vector<8x128xf32>
    %40 = vector.multi_reduction <add>, %39, %cst_21 [0] : vector<2x8x128xf32> to vector<8x128xf32>
    %c0_22 = arith.constant 0 : index
    %c3 = arith.constant 3 : index
    %c0_23 = arith.constant 0 : index
    %c0_24 = arith.constant 0 : index
    %41 = vector.load %arg3[%c0_22, %c3, %c0_23, %c0_24] : memref<1x4x8x128xf32, #tpu.memory_space<vmem>>, vector<1x1x8x128xf32>
    %42 = vector.shape_cast %41 : vector<1x1x8x128xf32> to vector<8x128xf32>
    %43 = vector.shape_cast %40 : vector<8x128xf32> to vector<1x1x8x128xf32>
    tpu.vector_store %arg3[%c0_22, %c3, %c0_23, %c0_24], %43 {strides = array<i32>} : memref<1x4x8x128xf32, #tpu.memory_space<vmem>>, vector<1x1x8x128xf32>,
    return
  }
  func.func @transform_0(%arg0: i32) -> (i32, i32) {
    %c0_i32 = arith.constant 0 : i32
    %c0_i32_0 = arith.constant 0 : i32
    return %arg0, %c0_i32 : i32, i32
  }
  func.func @transform_1(%arg0: i32) -> (i32, i32) {
    %c0_i32 = arith.constant 0 : i32
    %c0_i32_0 = arith.constant 0 : i32
    return %arg0, %c0_i32 : i32, i32
  }
  func.func @transform_2(%arg0: i32) -> (i32, i32, i32, i32) {
    %c0_i32 = arith.constant 0 : i32
    %c0_i32_0 = arith.constant 0 : i32
    %c0_i32_1 = arith.constant 0 : i32
    %c0_i32_2 = arith.constant 0 : i32
    return %arg0, %c0_i32, %c0_i32_0, %c0_i32_1 : i32, i32, i32, i32
  }
}

</mosaic_0001>

<llo_original>
// kernel: tpu_custom_call.1
$region0: #{tpu_custom_call.1}
  #allocation0 [shape = 'u32[]', space=smem, size = 0x4, offset = 0x4, fixed_abs, tag = 'smem constant byte address 0x4 - core index']
  #allocation1 [shape = 'u32[144,128]{1,0:T(1,128)}', space=vmem, size = 0x12000, scoped, tag = 'internal scratch']
  %s0 = inlined_call_operand.hbm [shape: f32[16,128], index: 0, kind: input, shape index: {}]
  %s1 = inlined_call_operand.hbm [shape: f32[16,128], index: 1, kind: input, shape index: {}]
  %s2 = inlined_call_operand.hbm [shape: f32[1,4,8,128], index: 2, kind: output, shape index: {}]
  %s3 = sld [smem:[#allocation0]]
  $region26: #{tpu_custom_call.1} parent=0
    _
  %s5 = ssub.s32 1, %s3
  %s6 = scalar_select 0, %s5, %s3
  $region1: #{tpu_custom_call.1} parent=0
    #allocation2 [shape = 'u8[8192]{0}', space=vmem, size = 0x2000, scoped, tag = 'input window, operand 0, single buffered']
    #allocation3 [shape = 's32[1]{0}', space=sflag, size = 0x4, scoped, tag = 'scoped memory for tpu_custom_call.1']
    #allocation4 [shape = 's32[1]{0}', space=sflag, size = 0x4, scoped, tag = 'scoped memory for tpu_custom_call.1']
    #allocation5 [shape = 'u8[8192]{0}', space=vmem, size = 0x2000, scoped, tag = 'input window, operand 1, single buffered']
    #allocation6 [shape = 's32[1]{0}', space=sflag, size = 0x4, scoped, tag = 'scoped memory for tpu_custom_call.1']
    #allocation7 [shape = 'u8[16384]{0}', space=vmem, size = 0x4000, scoped, tag = 'output window, operand 0, single buffered']
    %7 = vsyncpa [#allocation3], 0
    %8 = vsyncpa [#allocation6], 0
    %9 = vsyncpa [#allocation4], 0
    // Predicated region
    $region2: #{tpu_custom_call.1} parent=1 // pred_check
      _
    $region3: #{tpu_custom_call.1} parent=1 // pred_check_branch
      %11 = sbr.rel (0) target = $region5
    $region4: #{tpu_custom_call.1} parent=1 // pred_region
      %s13 = ssub.s32 256, 256
      %14 = vsyncadd [#allocation3], %s13
      %s15 = sshll.u32 [#allocation2], 4
      %s16 = int_to_ptr.vmem [resolvable:$true] %s15
      %21 = dma.hbm_to_vmem [thread:$0]  %s0, 256, %s16, [#allocation3], 128, 128, 8
    $region5: #{tpu_custom_call.1} parent=1 // pred_fallthru
      _
    // Predicated region
    $region6: #{tpu_custom_call.1} parent=1 // pred_check
      _
    $region7: #{tpu_custom_call.1} parent=1 // pred_check_branch
      %23 = sbr.rel (0) target = $region9
    $region8: #{tpu_custom_call.1} parent=1 // pred_region
      %s25 = ssub.s32 256, 256
      %26 = vsyncadd [#allocation6], %s25
      %s27 = sshll.u32 [#allocation5], 4
      %s28 = int_to_ptr.vmem [resolvable:$true] %s27
      %33 = dma.hbm_to_vmem [thread:$0]  %s1, 256, %s28, [#allocation6], 128, 128, 8
    $region9: #{tpu_custom_call.1} parent=1 // pred_fallthru
      _
    // Predicated region
    $region10: #{tpu_custom_call.1} parent=1 // pred_check
      _
    $region11: #{tpu_custom_call.1} parent=1 // pred_check_branch
      %35 = sbr.rel (0) target = $region13
    $region12: #{tpu_custom_call.1} parent=1 // pred_region
      %36 = dma.done [#allocation3], 256
    $region13: #{tpu_custom_call.1} parent=1 // pred_fallthru
      _
    // Predicated region
    $region14: #{tpu_custom_call.1} parent=1 // pred_check
      _
    $region15: #{tpu_custom_call.1} parent=1 // pred_check_branch
      %38 = sbr.rel (0) target = $region17
    $region16: #{tpu_custom_call.1} parent=1 // pred_region
      %39 = dma.done [#allocation6], 256
    $region17: #{tpu_custom_call.1} parent=1 // pred_fallthru
      _
    %v40 = vld [vmem:[#allocation2] sm:$0xff]
    %v41 = vld [vmem:[#allocation2 + $0x8] sm:$0xff]
    %v42 = vld [vmem:[#allocation5] sm:$0xff]
    %v43 = vld [vmem:[#allocation5 + $0x8] sm:$0xff]
    %v44 = vand.u32 2147483647, %v40
    %v45 = vand.u32 2147483647, %v41
    %v46 = vsub.f32 0.0, %v44
    %v47 = vsub.f32 0.0, %v45
    %v48 = vmul.f32 %v46, 1.442695
    %v49 = vpow.pop %v48
    %v50 = vmul.f32 %v47, 1.442695
    %v51 = vpow.pop %v50
    %v52 = vadd.f32 %v49, 1.0
    %v53 = vadd.f32 %v51, 1.0
    %v54 = vrcp.pop %v52
    %v55 = vrcp.pop %v53
    %vm56 = vcmp.ge.f32.partialorder %v40, 0.0
    %vm57 = vcmp.ge.f32.partialorder %v41, 0.0
    %v58 = vmul.f32 %v49, %v54
    %v59 = vmul.f32 %v51, %v55
    %v60 = vsel %vm56, %v54, %v58
    %v61 = vsel %vm57, %v55, %v59
    %v62 = vmul.f32 %v42, 0.8
    %v63 = vmul.f32 %v43, 0.8
    %v64 = vadd.f32 %v62, 0.1
    %v65 = vadd.f32 %v63, 0.1
    %v66 = vmax.f32 %v40, 0.0
    %v67 = vmax.f32 %v41, 0.0
    %v68 = vmul.f32 %v40, %v64
    %v69 = vmul.f32 %v41, %v65
    %v70 = vsub.f32 %v66, %v68
    %v71 = vsub.f32 %v67, %v69
    %v72 = vadd.f32 %v49, 1.0
    %v73 = vlog2.pop %v72
    %v74 = vmul.f32 %v73, 0.6931472
    %v75 = vmul.f32 -0.5, %v49
    %v76 = vadd.f32 %v75, 1.0
    %v77 = vmul.f32 %v76, %v49
    %v78 = vand.u32 2147483647, %v49
    %vm79 = vcmp.lt.f32.partialorder %v78, 0.0004427343
    %v80 = vsel %vm79, %v77, %v74
    %v81 = vadd.f32 %v51, 1.0
    %v82 = vlog2.pop %v81
    %v83 = vmul.f32 %v82, 0.6931472
    %v84 = vmul.f32 -0.5, %v51
    %v85 = vadd.f32 %v84, 1.0
    %v86 = vmul.f32 %v85, %v51
    %v87 = vand.u32 2147483647, %v51
    %vm88 = vcmp.lt.f32.partialorder %v87, 0.0004427343
    %v89 = vsel %vm88, %v86, %v83
    %v90 = vadd.f32 %v70, %v80
    %v91 = vadd.f32 %v71, %v89
    %v92 = vmul.f32 %v60, %v42
    %v93 = vmul.f32 %v61, %v43
    %v94 = vadd.f32 %v92, %v93
    %95 = vst [vmem:[#allocation7] sm:$0xff] %v94
    %v96 = vadd.f32 %v60, %v61
    %s97 = scalar_lea.vmem [#allocation7], 8
    %98 = vst [vmem:[%s97] sm:$0xff] %v96
    %v99 = vadd.f32 %v42, %v43
    %s100 = scalar_lea.vmem [#allocation7], 16
    %101 = vst [vmem:[%s100] sm:$0xff] %v99
    %v102 = vadd.f32 %v90, %v91
    %s103 = scalar_lea.vmem [#allocation7], 24
    %104 = vst [vmem:[%s103] sm:$0xff] %v102
    // Predicated region
    $region18: #{tpu_custom_call.1} parent=1 // pred_check
      _
    $region19: #{tpu_custom_call.1} parent=1 // pred_check_branch
      %106 = sbr.rel (0) target = $region21
    $region20: #{tpu_custom_call.1} parent=1 // pred_region
      %s108 = ssub.s32 512, 512
      %109 = vsyncadd [#allocation4], %s108
      %s110 = sshll.u32 [#allocation7], 4
      %s111 = int_to_ptr.vmem [resolvable:$true] %s110
      %116 = dma.vmem_to_hbm [thread:$0]  %s111, 512, %s2, [#allocation4], 128, 128, 8
    $region21: #{tpu_custom_call.1} parent=1 // pred_fallthru
      _
    // Predicated region
    $region22: #{tpu_custom_call.1} parent=1 // pred_check
      _
    $region23: #{tpu_custom_call.1} parent=1 // pred_check_branch
      %118 = sbr.rel (0) target = $region25
    $region24: #{tpu_custom_call.1} parent=1 // pred_region
      %119 = dma.done [#allocation4], 512
    $region25: #{tpu_custom_call.1} parent=1 // pred_fallthru
      _
    %120 = vsyncpa [#allocation3], 1
    %121 = vsyncpa [#allocation6], 1
    %122 = vsyncpa [#allocation4], 1

</llo_original>
